<compile_context>
chip_gen: v7x
topology: tpu7x:2x2x1
jax: 0.10.0
libtpu: 0.0.40
codegen_flags: <defaults>
</compile_context>

<pallas_src>
import functools

import numpy as np
import jax
import jax.numpy as jnp
from jax.experimental import pallas as pl
from jax.experimental.pallas import tpu as pltpu

_HIGHEST = jax.lax.Precision.HIGHEST


def _lane_tile(v, reps):
    """Repeat a (B, E) value `reps` times along lanes -> (B, reps*E)."""
    return v if reps == 1 else jnp.concatenate([v] * reps, axis=-1)


# ----------------------------- cond MLP kernel ------------------------------ #

def _cond_mlp_kernel(c_ref, w_ref, b_ref, g_ref, beta_ref, a_ref, *, E, G):
    """(1+gamma, beta, 1+alpha) = chunk(SiLU(cond) @ W^T + b, 3).

    gamma/beta are written already tiled G times along lanes (the packed-row
    layout consumed by the LayerNorm kernel), killing host-side tile/reshape.
    """
    c = c_ref[...].astype(jnp.float32)                               # (B, E)
    s = c * (1.0 / (1.0 + jnp.exp(-c)))                              # SiLU (EUP)
    m = jnp.dot(s, w_ref[...], preferred_element_type=jnp.float32,
                precision=_HIGHEST) + b_ref[...]                     # (B, 3E)
    gamma1 = 1.0 + m[:, 0 * E:1 * E]
    beta = m[:, 1 * E:2 * E]
    alpha1 = 1.0 + m[:, 2 * E:3 * E]
    g_ref[...] = _lane_tile(gamma1, G).astype(g_ref.dtype)           # (B, G*E)
    beta_ref[...] = _lane_tile(beta, G).astype(beta_ref.dtype)
    a_ref[...] = alpha1.astype(a_ref.dtype)


# ------------------------ LayerNorm + modulate kernels ----------------------- #

def _ada_ln_pool_kernel(x_ref, pool_ref, g_ref, b_ref, o_ref, *, eps):
    """Packed-row LayerNorm + modulate (E < 128, G = L // E tokens per row).

    x_ref:    (1, TR, L) — each 128-lane row packs G consecutive tokens.
    pool_ref: (L, L)     — block-diagonal mean pooling; x @ pool broadcasts
                           each token's mean over its own E lanes (MXU).
    g_ref/b_ref: (1, 1, L) — per-batch (1+gamma) / beta, pre-tiled G times.
    """
    x = x_ref[0].astype(jnp.float32)                                 # (TR, L)
    pool = pool_ref[...]
    # mean and E[x^2] both depend only on x -> two independent MXU pushes.
    mean = jnp.dot(x, pool, preferred_element_type=jnp.float32,
                   precision=_HIGHEST)
    ex2 = jnp.dot(x * x, pool, preferred_element_type=jnp.float32,
                  precision=_HIGHEST)
    var = jnp.maximum(ex2 - mean * mean, 0.0)                        # cancel guard
    h = (x - mean) * jax.lax.rsqrt(var + eps)                        # EUP rsqrt
    o_ref[...] = (h * g_ref[0] + b_ref[0])[None].astype(o_ref.dtype)


def _ada_ln_reduce_kernel(x_ref, g_ref, b_ref, o_ref, *, eps):
    """Plain lane-reduction LayerNorm + modulate (E >= 128 or E not | 128)."""
    x = x_ref[0].astype(jnp.float32)                                 # (TR, E)
    mean = jnp.mean(x, axis=-1, keepdims=True)
    ex2 = jnp.mean(x * x, axis=-1, keepdims=True)
    var = jnp.maximum(ex2 - mean * mean, 0.0)
    h = (x - mean) * jax.lax.rsqrt(var + eps)
    o_ref[...] = (h * g_ref[0] + b_ref[0])[None].astype(o_ref.dtype)


# -------------------------------- host wrapper ------------------------------ #

def _pick_rows_per_tile(rows, L, itemsize, max_rows):
    """Largest row tile keeping double-buffered x/out blocks plus in-kernel
    f32 temporaries comfortably under the scoped-VMEM budget."""
    budget = 24 * 1024 * 1024
    per_row = L * (4 * itemsize + 16)      # 2x2-buffered I/O + ~4 f32 temps
    cap = max(8, budget // per_row)
    tr = min(max_rows, cap)
    if tr >= rows:
        return rows                        # single full-extent row block
    return max(8, (tr // 8) * 8)


def ada_layer_norm(x, cond, w, b, *, eps=1e-5, max_rows_per_tile=1024):
    """x: (B, ..., E). cond: one conditioning vector per batch item, shape
    broadcastable against x (e.g. (B, 1, ..., E)). w: (3E, E), b: (3E,) in
    torch nn.Linear layout.  Returns (modulated LayerNorm(x), 1 + alpha).
    On v7x, consider max_rows_per_tile=2048 and bf16 I/O for x."""
    E = x.shape[-1]
    B = x.shape[0]
    N = int(np.prod(x.shape[1:-1], dtype=np.int64))                  # tokens/batch
    x3 = x.reshape(B, N, E)

    cond2 = cond.reshape(-1, E)
    assert cond2.shape[0] == B, "expect one conditioning vector per batch item"

    # ---- lane packing: G tokens per 128-lane row, only when E < 128 ----
    if E < 128 and 128 % E == 0:
        G = 128 // E
    else:
        G = 1
        # TODO(synk): for E < 128 with 128 % E != 0 (e.g. 96), pack/pad tokens
        # into full 128-lane rows instead of emitting sub-128-lane blocks.
    L = G * E

    rows = pl.cdiv(N, G)
    if rows * G != N:            # at most G-1 tokens of padding, only if needed
        x3 = jnp.pad(x3, ((0, 0), (0, rows * G - N), (0, 0)))
    xp = x3.reshape(B, rows, L)  # free: same row-major layout

    # ---- cond MLP: tiny one-shot kernel, emits packed-row gamma/beta ----
    w_t = jnp.asarray(w, jnp.float32).T                  # (E, 3E) lane-dense out
    b2 = jnp.asarray(b, jnp.float32).reshape(1, 3 * E)
    full = lambda i: (0, 0)
    gp1, beta, ap1 = pl.pallas_call(
        functools.partial(_cond_mlp_kernel, E=E, G=G),
        out_shape=(jax.ShapeDtypeStruct((B, L), jnp.float32),
                   jax.ShapeDtypeStruct((B, L), jnp.float32),
                   jax.ShapeDtypeStruct((B, E), cond.dtype)),
        grid=(1,),
        in_specs=[pl.BlockSpec((B, E), full),
                  pl.BlockSpec((E, 3 * E), full),
                  pl.BlockSpec((1, 3 * E), full)],
        out_specs=(pl.BlockSpec((B, L), full),
                   pl.BlockSpec((B, L), full),
                   pl.BlockSpec((B, E), full)),
    )(cond2.astype(jnp.float32), w_t, b2)
    gp1_t = gp1.reshape(B, 1, L)                          # free reshapes
    beta_t = beta.reshape(B, 1, L)

    # ---- main pass: LayerNorm + modulate, tiled over packed token rows ----
    TR = _pick_rows_per_tile(rows, L, jnp.dtype(x.dtype).itemsize,
                             max_rows_per_tile)
    num_row_tiles = pl.cdiv(rows, TR)     # ragged final block masked by Pallas

    x_spec = pl.BlockSpec((1, TR, L), lambda ri, bi: (bi, ri, 0))
    gb_spec = pl.BlockSpec((1, 1, L), lambda ri, bi: (bi, 0, 0))
    out_spec = pl.BlockSpec((1, TR, L), lambda ri, bi: (bi, ri, 0))

    if G > 1:
        # Block-diagonal mean-pooling matrix: moves the per-token reduction
        # onto the otherwise-idle MXU.  Only used for E < 128, so it is capped
        # at (128, 128) f32 = 64 KiB.
        pool = jnp.asarray(np.kron(np.eye(G, dtype=np.float32),
                                   np.full((E, E), 1.0 / E, np.float32)))
        kernel = functools.partial(_ada_ln_pool_kernel, eps=eps)
        in_specs = [x_spec,
                    pl.BlockSpec((L, L), lambda ri, bi: (0, 0)),
                    gb_spec, gb_spec]
        args = (xp, pool, gp1_t, beta_t)
    else:
        kernel = functools.partial(_ada_ln_reduce_kernel, eps=eps)
        in_specs = [x_spec, gb_spec, gb_spec]
        args = (xp, gp1_t, beta_t)

    out = pl.pallas_call(
        kernel,
        out_shape=jax.ShapeDtypeStruct((B, rows, L), x.dtype),
        grid=(num_row_tiles, B),          # rows lead: 2-TC sharding even at B=1
        in_specs=in_specs,
        out_specs=out_spec,
        compiler_params=pltpu.CompilerParams(
            dimension_semantics=("parallel", "parallel"),
            vmem_limit_bytes=64 * 1024 * 1024),
    )(*args)

    if rows * G != N:
        h = out.reshape(B, rows * G, E)[:, :N, :].reshape(x.shape)
    else:
        h = out.reshape(x.shape)          # free: same row-major layout
    scale = ap1.reshape(cond.shape)
    return h, scale


# ------------------------- pure-JAX reference check ------------------------- #

def reference(x, cond, w, b, eps=1e-5):
    mean = jnp.mean(x, axis=-1, keepdims=True)
    var = jnp.mean(jnp.square(x - mean), axis=-1, keepdims=True)
    h = (x - mean) / jnp.sqrt(var + eps)
    c = cond / (1.0 + jnp.exp(-cond))                     # SiLU
    m = c @ w.T + b
    gamma, beta, alpha = jnp.split(m, 3, axis=-1)
    return (1.0 + gamma) * h + beta, 1.0 + alpha


# ----------------------------------- main ----------------------------------- #

if __name__ == "__main__":
    B, T, S, E = 2, 8, 16, 32      # batch, frames, tokens-per-frame, embed_dim
    key = jax.random.PRNGKey(0)
    kx, kc, kw, kb = jax.random.split(key, 4)
    x = jax.random.normal(kx, (B, T, S, E), jnp.float32)
    cond = jax.random.normal(kc, (B, 1, 1, E), jnp.float32)
    # The real module zero-inits the cond MLP (gamma=beta=alpha=0); use small
    # random weights so the numerical check is non-trivial.
    w = jax.random.normal(kw, (3 * E, E), jnp.float32) * 0.05
    b = jax.random.normal(kb, (3 * E,), jnp.float32) * 0.05

    h, scale = ada_layer_norm(x, cond, w, b)
    h, scale = jax.block_until_ready((h, scale))

    with jax.default_matmul_precision("highest"):
        h_ref, scale_ref = reference(x, cond, w, b)
    np.testing.assert_allclose(np.asarray(h), np.asarray(h_ref),
                               rtol=2e-4, atol=2e-4)
    np.testing.assert_allclose(np.asarray(scale), np.asarray(scale_ref),
                               rtol=2e-4, atol=2e-4)
    print("KERNEL_OK")
</pallas_src>

<mosaic_0001>
module attributes {stable_mosaic.version = 11 : i64} {
  func.func @_cond_mlp_kernel(%arg0: i32, %arg1: memref<2x32xf32, #tpu.memory_space<vmem>>, %arg2: memref<32x96xf32, #tpu.memory_space<vmem>>, %arg3: memref<1x96xf32, #tpu.memory_space<vmem>>, %arg4: memref<2x128xf32, #tpu.memory_space<vmem>>, %arg5: memref<2x128xf32, #tpu.memory_space<vmem>>, %arg6: memref<2x32xf32, #tpu.memory_space<vmem>>) attributes {dimension_semantics = [#tpu.dimension_semantics<arbitrary>], iteration_bounds = array<i64: 1>, scalar_prefetch = 0 : i64, scratch_operands = 0 : i64, tpu.core_type = #tpu.core_type<tc>, window_params = [{pipeline_mode = #tpu.pipeline_mode<synchronous>, transform_indices = @transform_0, window_bounds = array<i64: 2, 32>}, {pipeline_mode = #tpu.pipeline_mode<synchronous>, transform_indices = @transform_1, window_bounds = array<i64: 32, 96>}, {pipeline_mode = #tpu.pipeline_mode<synchronous>, transform_indices = @transform_2, window_bounds = array<i64: 1, 96>}, {pipeline_mode = #tpu.pipeline_mode<synchronous>, transform_indices = @transform_3, window_bounds = array<i64: 2, 128>}, {pipeline_mode = #tpu.pipeline_mode<synchronous>, transform_indices = @transform_4, window_bounds = array<i64: 2, 128>}, {pipeline_mode = #tpu.pipeline_mode<synchronous>, transform_indices = @transform_5, window_bounds = array<i64: 2, 32>}]} {
    %c0 = arith.constant 0 : index
    %c0_0 = arith.constant 0 : index
    %0 = vector.load %arg1[%c0, %c0_0] : memref<2x32xf32, #tpu.memory_space<vmem>>, vector<2x32xf32>
    %cst = arith.constant 0.000000e+00 : f32
    %1 = vector.broadcast %cst : f32 to vector<2x32xf32>
    %2 = arith.subf %1, %0 : vector<2x32xf32>
    %3 = math.exp %2 : vector<2x32xf32>
    %cst_1 = arith.constant 1.000000e+00 : f32
    %4 = vector.broadcast %cst_1 : f32 to vector<2x32xf32>
    %5 = arith.addf %4, %3 : vector<2x32xf32>
    %cst_2 = arith.constant 1.000000e+00 : f32
    %6 = vector.broadcast %cst_2 : f32 to vector<2x32xf32>
    %7 = arith.divf %6, %5 : vector<2x32xf32>
    %8 = arith.mulf %0, %7 : vector<2x32xf32>
    %c0_3 = arith.constant 0 : index
    %c0_4 = arith.constant 0 : index
    %9 = vector.load %arg2[%c0_3, %c0_4] : memref<32x96xf32, #tpu.memory_space<vmem>>, vector<32x96xf32>
    %cst_5 = arith.constant dense<0.000000e+00> : vector<2x96xf32>
    %10 = tpu.matmul %8, %9, %cst_5 {dimension_numbers = #tpu.dot_dimension_numbers<[1], [0], [0], [1], [0, 0, 1, 1], [], []>, precision = #tpu.contract_precision<fp32>} : vector<2x32xf32>, vector<32x96xf32>, vector<2x96xf32> -> vector<2x96xf32>
    %c0_6 = arith.constant 0 : index
    %c0_7 = arith.constant 0 : index
    %11 = vector.load %arg3[%c0_6, %c0_7] : memref<1x96xf32, #tpu.memory_space<vmem>>, vector<1x96xf32>
    %12 = vector.broadcast %11 : vector<1x96xf32> to vector<2x96xf32>
    %13 = arith.addf %10, %12 : vector<2x96xf32>
    %14 = vector.extract_strided_slice %13 {offsets = [0, 0], sizes = [2, 32], strides = [1, 1]} : vector<2x96xf32> to vector<2x32xf32>
    %cst_8 = arith.constant 1.000000e+00 : f32
    %15 = vector.broadcast %cst_8 : f32 to vector<2x32xf32>
    %16 = arith.addf %15, %14 : vector<2x32xf32>
    %17 = vector.extract_strided_slice %13 {offsets = [0, 32], sizes = [2, 32], strides = [1, 1]} : vector<2x96xf32> to vector<2x32xf32>
    %18 = vector.extract_strided_slice %13 {offsets = [0, 64], sizes = [2, 32], strides = [1, 1]} : vector<2x96xf32> to vector<2x32xf32>
    %cst_9 = arith.constant 1.000000e+00 : f32
    %19 = vector.broadcast %cst_9 : f32 to vector<2x32xf32>
    %20 = arith.addf %19, %18 : vector<2x32xf32>
    %21 = tpu.concatenate %16, %16, %16, %16 in 1 : vector<2x32xf32>, vector<2x32xf32>, vector<2x32xf32>, vector<2x32xf32> -> vector<2x128xf32>
    %c0_10 = arith.constant 0 : index
    %c0_11 = arith.constant 0 : index
    %22 = vector.load %arg4[%c0_10, %c0_11] : memref<2x128xf32, #tpu.memory_space<vmem>>, vector<2x128xf32>
    tpu.vector_store %arg4[%c0_10, %c0_11], %21 {strides = array<i32>} : memref<2x128xf32, #tpu.memory_space<vmem>>, vector<2x128xf32>,
    %23 = tpu.concatenate %17, %17, %17, %17 in 1 : vector<2x32xf32>, vector<2x32xf32>, vector<2x32xf32>, vector<2x32xf32> -> vector<2x128xf32>
    %c0_12 = arith.constant 0 : index
    %c0_13 = arith.constant 0 : index
    %24 = vector.load %arg5[%c0_12, %c0_13] : memref<2x128xf32, #tpu.memory_space<vmem>>, vector<2x128xf32>
    tpu.vector_store %arg5[%c0_12, %c0_13], %23 {strides = array<i32>} : memref<2x128xf32, #tpu.memory_space<vmem>>, vector<2x128xf32>,
    %c0_14 = arith.constant 0 : index
    %c0_15 = arith.constant 0 : index
    %25 = vector.load %arg6[%c0_14, %c0_15] : memref<2x32xf32, #tpu.memory_space<vmem>>, vector<2x32xf32>
    tpu.vector_store %arg6[%c0_14, %c0_15], %20 {strides = array<i32>} : memref<2x32xf32, #tpu.memory_space<vmem>>, vector<2x32xf32>,
    return
  }
  func.func @transform_0(%arg0: i32) -> (i32, i32) {
    %c0_i32 = arith.constant 0 : i32
    %c0_i32_0 = arith.constant 0 : i32
    %c0_i32_1 = arith.constant 0 : i32
    return %c0_i32, %c0_i32_0 : i32, i32
  }
  func.func @transform_1(%arg0: i32) -> (i32, i32) {
    %c0_i32 = arith.constant 0 : i32
    %c0_i32_0 = arith.constant 0 : i32
    %c0_i32_1 = arith.constant 0 : i32
    return %c0_i32, %c0_i32_0 : i32, i32
  }
  func.func @transform_2(%arg0: i32) -> (i32, i32) {
    %c0_i32 = arith.constant 0 : i32
    %c0_i32_0 = arith.constant 0 : i32
    %c0_i32_1 = arith.constant 0 : i32
    return %c0_i32, %c0_i32_0 : i32, i32
  }
  func.func @transform_3(%arg0: i32) -> (i32, i32) {
    %c0_i32 = arith.constant 0 : i32
    %c0_i32_0 = arith.constant 0 : i32
    %c0_i32_1 = arith.constant 0 : i32
    return %c0_i32, %c0_i32_0 : i32, i32
  }
  func.func @transform_4(%arg0: i32) -> (i32, i32) {
    %c0_i32 = arith.constant 0 : i32
    %c0_i32_0 = arith.constant 0 : i32
    %c0_i32_1 = arith.constant 0 : i32
    return %c0_i32, %c0_i32_0 : i32, i32
  }
  func.func @transform_5(%arg0: i32) -> (i32, i32) {
    %c0_i32 = arith.constant 0 : i32
    %c0_i32_0 = arith.constant 0 : i32
    %c0_i32_1 = arith.constant 0 : i32
    return %c0_i32, %c0_i32_0 : i32, i32
  }
}

</mosaic_0001>

<llo_original>
// kernel: tpu_custom_call.1
$region0: #{tpu_custom_call.1}
  #allocation0 [shape = 'u32[]', space=smem, size = 0x4, offset = 0x4, fixed_abs, tag = 'smem constant byte address 0x4 - core index']
  #allocation1 [shape = 'u32[144,128]{1,0:T(1,128)}', space=vmem, size = 0x12000, scoped, tag = 'internal scratch']
  %s0 = inlined_call_operand.hbm [shape: f32[2,32], index: 0, kind: input, shape index: {}]
  %s1 = inlined_call_operand.hbm [shape: f32[32,96], index: 1, kind: input, shape index: {}]
  %s2 = inlined_call_operand.vmem [shape: f32[1,96], index: 2, kind: input, shape index: {}]
  %s3 = inlined_call_operand.hbm [shape: f32[2,128], index: 3, kind: output, shape index: {0}]
  %s4 = inlined_call_operand.hbm [shape: f32[2,128], index: 4, kind: output, shape index: {1}]
  %s5 = inlined_call_operand.hbm [shape: f32[2,32], index: 5, kind: output, shape index: {2}]
  %6 = xla_tuple %s3, %s4, %s5
  %s7 = sld [smem:[#allocation0]]
  $region46: #{tpu_custom_call.1} parent=0
    _
  %s9 = ssub.s32 1, %s7
  %s10 = scalar_select 0, %s9, %s7
  $region1: #{tpu_custom_call.1} parent=0
    #allocation2 [shape = 'u8[1024]{0}', space=vmem, size = 0x400, scoped, tag = 'input window, operand 0, single buffered']
    #allocation3 [shape = 's32[1]{0}', space=sflag, size = 0x4, scoped, tag = 'scoped memory for tpu_custom_call.1']
    #allocation4 [shape = 's32[1]{0}', space=sflag, size = 0x4, scoped, tag = 'scoped memory for tpu_custom_call.1']
    #allocation5 [shape = 'u8[16384]{0}', space=vmem, size = 0x4000, scoped, tag = 'input window, operand 1, single buffered']
    #allocation6 [shape = 's32[1]{0}', space=sflag, size = 0x4, scoped, tag = 'scoped memory for tpu_custom_call.1']
    #allocation7 [shape = 'u8[1024]{0}', space=vmem, size = 0x400, scoped, tag = 'output window, operand 0, single buffered']
    #allocation8 [shape = 'u8[1024]{0}', space=vmem, size = 0x400, scoped, tag = 'output window, operand 1, single buffered']
    #allocation9 [shape = 's32[1]{0}', space=sflag, size = 0x4, scoped, tag = 'scoped memory for tpu_custom_call.1']
    #allocation10 [shape = 'u8[1024]{0}', space=vmem, size = 0x400, scoped, tag = 'output window, operand 2, single buffered']
    %11 = vsyncpa [#allocation3], 0
    %12 = vsyncpa [#allocation6], 0
    %13 = vsyncpa [#allocation4], 0
    %14 = vsyncpa [#allocation9], 0
    // Predicated region
    $region2: #{tpu_custom_call.1} parent=1 // pred_check
      _
    $region3: #{tpu_custom_call.1} parent=1 // pred_check_branch
      %16 = sbr.rel (0) target = $region5
    $region4: #{tpu_custom_call.1} parent=1 // pred_region
      %s18 = ssub.s32 32, 32
      %19 = vsyncadd [#allocation3], %s18
      %s21 = sshll.u32 [#allocation2], 4
      %s22 = int_to_ptr.vmem [resolvable:$true] %s21
      %24 = dma.hbm_to_vmem [thread:$0]  %s0, 32, %s22, [#allocation3]
    $region5: #{tpu_custom_call.1} parent=1 // pred_fallthru
      _
    // Predicated region
    $region6: #{tpu_custom_call.1} parent=1 // pred_check
      _
    $region7: #{tpu_custom_call.1} parent=1 // pred_check_branch
      %26 = sbr.rel (0) target = $region9
    $region8: #{tpu_custom_call.1} parent=1 // pred_region
      %s28 = ssub.s32 512, 512
      %29 = vsyncadd [#allocation6], %s28
      %s30 = sshll.u32 [#allocation5], 4
      %s31 = int_to_ptr.vmem [resolvable:$true] %s30
      %36 = dma.hbm_to_vmem [thread:$0]  %s1, 512, %s31, [#allocation6], 128, 128, 8
    $region9: #{tpu_custom_call.1} parent=1 // pred_fallthru
      _
    // Predicated region
    $region10: #{tpu_custom_call.1} parent=1 // pred_check
      _
    $region11: #{tpu_custom_call.1} parent=1 // pred_check_branch
      %38 = sbr.rel (0) target = $region13
    $region12: #{tpu_custom_call.1} parent=1 // pred_region
      _
    $region13: #{tpu_custom_call.1} parent=1 // pred_fallthru
      _
    // Predicated region
    $region14: #{tpu_custom_call.1} parent=1 // pred_check
      _
    $region15: #{tpu_custom_call.1} parent=1 // pred_check_branch
      %40 = sbr.rel (0) target = $region17
    $region16: #{tpu_custom_call.1} parent=1 // pred_region
      %41 = dma.done [#allocation3], 32
    $region17: #{tpu_custom_call.1} parent=1 // pred_fallthru
      _
    // Predicated region
    $region18: #{tpu_custom_call.1} parent=1 // pred_check
      _
    $region19: #{tpu_custom_call.1} parent=1 // pred_check_branch
      %43 = sbr.rel (0) target = $region21
    $region20: #{tpu_custom_call.1} parent=1 // pred_region
      %44 = dma.done [#allocation6], 512
    $region21: #{tpu_custom_call.1} parent=1 // pred_fallthru
      _
    %v45 = vld [vmem:[#allocation2] sm:$0x3]
    %v46 = vsub.f32 0.0, %v45
    %v47 = vmul.f32 %v46, 1.442695
    %v48 = vpow.pop %v47
    %v49 = vadd.f32 %v48, 1.0
    %v50 = vrcp.pop %v49
    %v51 = vmul.f32 1.0, %v50
    %v52 = vmul.f32 %v45, %v51
    %v53 = vld [vmem:[#allocation5] sm:$0xff]
    %v54 = vld [vmem:[#allocation5 + $0x8] sm:$0xff]
    %v55 = vld [vmem:[#allocation5 + $0x10] sm:$0xff]
    %v56 = vld [vmem:[#allocation5 + $0x18] sm:$0xff]
    %v57 = vld [vmem:[%s2] sm:$0x1]
    %v59 = vlaneseq
    %v60 = vshrl.u32 %v59, 7
    %v61 = vsub.s32 0, %v60
    %v62 = vrot.slane %v57, %v61
    %vm64 = vcmask 261120
    %v66 = vsel %vm64, %v52, 0
    %68 = vmatprep.subr.mxu0 0.0
    %v69 = vand.u32 %v53, 4294901760
    %70 = vmatpush1.msra.mxu0 %v69
    %71 = vmatprep.subr.mxu0 0.0
    %v72 = vand.u32 %v54, 4294901760
    %73 = vmatpush1.msra.mxu0 %v72
    %74 = vmatprep.subr.mxu0 0.0
    %v75 = vand.u32 %v55, 4294901760
    %76 = vmatpush1.msra.mxu0 %v75
    %77 = vmatprep.subr.mxu0 0.0
    %v78 = vand.u32 %v56, 4294901760
    %79 = vmatpush1.msra.mxu0 %v78
    %80 = vmatprep.subr.mxu0 0.0
    %81 = vmatpush1.msra.mxu0 0.0
    %82 = vmatprep.subr.mxu0 0.0
    %83 = vmatpush1.msra.mxu0 0.0
    %84 = vmatprep.subr.mxu0 0.0
    %85 = vmatpush1.msra.mxu0 0.0
    %86 = vmatprep.subr.mxu0 0.0
    %87 = vmatpush1.msra.mxu0 0.0
    %88 = vmatprep.subr.mxu0 0.0
    %89 = vmatpush1.msra.mxu0 0.0
    %90 = vmatprep.subr.mxu0 0.0
    %91 = vmatpush1.msra.mxu0 0.0
    %92 = vmatprep.subr.mxu0 0.0
    %93 = vmatpush1.msra.mxu0 0.0
    %94 = vmatprep.subr.mxu0 0.0
    %95 = vmatpush1.msra.mxu0 0.0
    %96 = vmatprep.subr.mxu0 0.0
    %97 = vmatpush1.msra.mxu0 0.0
    %98 = vmatprep.subr.mxu0 0.0
    %99 = vmatpush1.msra.mxu0 0.0
    %100 = vmatprep.subr.mxu0 0.0
    %101 = vmatpush1.msra.mxu0 0.0
    %102 = vmatprep.subr.mxu0 0.0
    %103 = vmatpush1.msra.mxu0 0.0
    %104 = vmatprep.subr.mxu0 0.0
    %105 = vmatpush1.msra.mxu0 0.0
    %106 = vmatprep.subr.mxu0 0.0
    %107 = vmatpush1.msra.mxu0 0.0
    %108 = vmatprep.subr.mxu0 0.0
    %109 = vmatpush1.msra.mxu0 0.0
    %110 = vmatprep.subr.mxu0 0.0
    %111 = vmatpush1.msra.mxu0 0.0
    %112 = vmatprep.subr.mxu0 0.0
    %113 = vmatpush1.msra.mxu0 0.0
    %114 = vmatprep.subr.mxu0 0.0
    %115 = vmatpush1.msra.mxu0 0.0
    %116 = vmatprep.subr.mxu0 0.0
    %117 = vmatpush1.msra.mxu0 0.0
    %118 = vmatprep.subr.mxu0 0.0
    %119 = vmatpush1.msra.mxu0 0.0
    %120 = vmatprep.subr.mxu0 0.0
    %121 = vmatpush1.msra.mxu0 0.0
    %122 = vmatprep.subr.mxu0 0.0
    %123 = vmatpush1.msra.mxu0 0.0
    %124 = vmatprep.subr.mxu0 0.0
    %125 = vmatpush1.msra.mxu0 0.0
    %126 = vmatprep.subr.mxu0 0.0
    %127 = vmatpush1.msra.mxu0 0.0
    %128 = vmatprep.subr.mxu0 0.0
    %129 = vmatpush1.msra.mxu0 0.0
    %130 = vmatprep.subr.mxu0 0.0
    %131 = vmatpush1.msra.mxu0 0.0
    %132 = vmatprep.subr.mxu0 0.0
    %133 = vmatpush1.msra.mxu0 0.0
    %134 = vmatprep.subr.mxu0 0.0
    %135 = vmatpush1.msra.mxu0 0.0
    %136 = vmatprep.mubr.f32.mxu0 0.0
    %v137 = vand.u32 %v66, 4294901760
    %v138 = vsub.f32 %v66, %v137
    %v139 = vand.u32 %v138, 4294901760
    %v140 = vsub.f32 %v138, %v139
    %v141 = vand.u32 %v140, 4294901760
    %142 = vmatmul.mubr.f32.gmra.mrb[0].mxu0 %v141
    %v143 = vpop.f32.mrb[0].mxu0
    %v144 = vadd.f32 %v62, %v143
    %v145 = vpop.f32.mrb[0].mxu0
    %146 = vdwg.mxu0
    %147 = vmatprep.subr.mxu0 0.0
    %v148 = vand.u32 %v53, 4294901760
    %v149 = vsub.f32 %v53, %v148
    %v150 = vand.u32 %v149, 4294901760
    %v151 = vsub.f32 %v149, %v150
    %v152 = vand.u32 %v151, 4294901760
    %153 = vmatpush1.msra.mxu0 %v152
    %154 = vmatprep.subr.mxu0 0.0
    %v155 = vand.u32 %v54, 4294901760
    %v156 = vsub.f32 %v54, %v155
    %v157 = vand.u32 %v156, 4294901760
    %v158 = vsub.f32 %v156, %v157
    %v159 = vand.u32 %v158, 4294901760
    %160 = vmatpush1.msra.mxu0 %v159
    %161 = vmatprep.subr.mxu0 0.0
    %v162 = vand.u32 %v55, 4294901760
    %v163 = vsub.f32 %v55, %v162
    %v164 = vand.u32 %v163, 4294901760
    %v165 = vsub.f32 %v163, %v164
    %v166 = vand.u32 %v165, 4294901760
    %167 = vmatpush1.msra.mxu0 %v166
    %168 = vmatprep.subr.mxu0 0.0
    %v169 = vand.u32 %v56, 4294901760
    %v170 = vsub.f32 %v56, %v169
    %v171 = vand.u32 %v170, 4294901760
    %v172 = vsub.f32 %v170, %v171
    %v173 = vand.u32 %v172, 4294901760
    %174 = vmatpush1.msra.mxu0 %v173
    %175 = vmatprep.subr.mxu0 0.0
    %176 = vmatpush1.msra.mxu0 0.0
    %177 = vmatprep.subr.mxu0 0.0
    %178 = vmatpush1.msra.mxu0 0.0
    %179 = vmatprep.subr.mxu0 0.0
    %180 = vmatpush1.msra.mxu0 0.0
    %181 = vmatprep.subr.mxu0 0.0
    %182 = vmatpush1.msra.mxu0 0.0
    %183 = vmatprep.subr.mxu0 0.0
    %184 = vmatpush1.msra.mxu0 0.0
    %185 = vmatprep.subr.mxu0 0.0
    %186 = vmatpush1.msra.mxu0 0.0
    %187 = vmatprep.subr.mxu0 0.0
    %188 = vmatpush1.msra.mxu0 0.0
    %189 = vmatprep.subr.mxu0 0.0
    %190 = vmatpush1.msra.mxu0 0.0
    %191 = vmatprep.subr.mxu0 0.0
    %192 = vmatpush1.msra.mxu0 0.0
    %193 = vmatprep.subr.mxu0 0.0
    %194 = vmatpush1.msra.mxu0 0.0
    %195 = vmatprep.subr.mxu0 0.0
    %196 = vmatpush1.msra.mxu0 0.0
    %197 = vmatprep.subr.mxu0 0.0
    %198 = vmatpush1.msra.mxu0 0.0
    %199 = vmatprep.subr.mxu0 0.0
    %200 = vmatpush1.msra.mxu0 0.0
    %201 = vmatprep.subr.mxu0 0.0
    %202 = vmatpush1.msra.mxu0 0.0
    %203 = vmatprep.subr.mxu0 0.0
    %204 = vmatpush1.msra.mxu0 0.0
    %205 = vmatprep.subr.mxu0 0.0
    %206 = vmatpush1.msra.mxu0 0.0
    %207 = vmatprep.subr.mxu0 0.0
    %208 = vmatpush1.msra.mxu0 0.0
    %209 = vmatprep.subr.mxu0 0.0
    %210 = vmatpush1.msra.mxu0 0.0
    %211 = vmatprep.subr.mxu0 0.0
    %212 = vmatpush1.msra.mxu0 0.0
    %213 = vmatprep.subr.mxu0 0.0
    %214 = vmatpush1.msra.mxu0 0.0
    %215 = vmatprep.subr.mxu0 0.0
    %216 = vmatpush1.msra.mxu0 0.0
    %217 = vmatprep.subr.mxu0 0.0
    %218 = vmatpush1.msra.mxu0 0.0
    %219 = vmatprep.subr.mxu0 0.0
    %220 = vmatpush1.msra.mxu0 0.0
    %221 = vmatprep.subr.mxu0 0.0
    %222 = vmatpush1.msra.mxu0 0.0
    %223 = vmatprep.subr.mxu0 0.0
    %224 = vmatpush1.msra.mxu0 0.0
    %225 = vmatprep.subr.mxu0 0.0
    %226 = vmatpush1.msra.mxu0 0.0
    %227 = vmatprep.subr.mxu0 0.0
    %228 = vmatpush1.msra.mxu0 0.0
    %229 = vmatprep.subr.mxu0 0.0
    %230 = vmatpush1.msra.mxu0 0.0
    %231 = vmatprep.mubr.f32.mxu0 0.0
    %v232 = vand.u32 %v66, 4294901760
    %233 = vmatmul.mubr.f32.gmra.mrb[0].mxu0 %v232
    %v234 = vpop.f32.mrb[0].mxu0
    %v235 = vadd.f32 %v144, %v234
    %v236 = vpop.f32.mrb[0].mxu0
    %237 = vdwg.mxu0
    %238 = vmatprep.subr.mxu0 0.0
    %v239 = vand.u32 %v53, 4294901760
    %v240 = vsub.f32 %v53, %v239
    %241 = vmatpush1.msra.mxu0 %v240
    %242 = vmatprep.subr.mxu0 0.0
    %v243 = vand.u32 %v54, 4294901760
    %v244 = vsub.f32 %v54, %v243
    %245 = vmatpush1.msra.mxu0 %v244
    %246 = vmatprep.subr.mxu0 0.0
    %v247 = vand.u32 %v55, 4294901760
    %v248 = vsub.f32 %v55, %v247
    %249 = vmatpush1.msra.mxu0 %v248
    %250 = vmatprep.subr.mxu0 0.0
    %v251 = vand.u32 %v56, 4294901760
    %v252 = vsub.f32 %v56, %v251
    %253 = vmatpush1.msra.mxu0 %v252
    %254 = vmatprep.subr.mxu0 0.0
    %255 = vmatpush1.msra.mxu0 0.0
    %256 = vmatprep.subr.mxu0 0.0
    %257 = vmatpush1.msra.mxu0 0.0
    %258 = vmatprep.subr.mxu0 0.0
    %259 = vmatpush1.msra.mxu0 0.0
    %260 = vmatprep.subr.mxu0 0.0
    %261 = vmatpush1.msra.mxu0 0.0
    %262 = vmatprep.subr.mxu0 0.0
    %263 = vmatpush1.msra.mxu0 0.0
    %264 = vmatprep.subr.mxu0 0.0
    %265 = vmatpush1.msra.mxu0 0.0
    %266 = vmatprep.subr.mxu0 0.0
    %267 = vmatpush1.msra.mxu0 0.0
    %268 = vmatprep.subr.mxu0 0.0
    %269 = vmatpush1.msra.mxu0 0.0
    %270 = vmatprep.subr.mxu0 0.0
    %271 = vmatpush1.msra.mxu0 0.0
    %272 = vmatprep.subr.mxu0 0.0
    %273 = vmatpush1.msra.mxu0 0.0
    %274 = vmatprep.subr.mxu0 0.0
    %275 = vmatpush1.msra.mxu0 0.0
    %276 = vmatprep.subr.mxu0 0.0
    %277 = vmatpush1.msra.mxu0 0.0
    %278 = vmatprep.subr.mxu0 0.0
    %279 = vmatpush1.msra.mxu0 0.0
    %280 = vmatprep.subr.mxu0 0.0
    %281 = vmatpush1.msra.mxu0 0.0
    %282 = vmatprep.subr.mxu0 0.0
    %283 = vmatpush1.msra.mxu0 0.0
    %284 = vmatprep.subr.mxu0 0.0
    %285 = vmatpush1.msra.mxu0 0.0
    %286 = vmatprep.subr.mxu0 0.0
    %287 = vmatpush1.msra.mxu0 0.0
    %288 = vmatprep.subr.mxu0 0.0
    %289 = vmatpush1.msra.mxu0 0.0
    %290 = vmatprep.subr.mxu0 0.0
    %291 = vmatpush1.msra.mxu0 0.0
    %292 = vmatprep.subr.mxu0 0.0
    %293 = vmatpush1.msra.mxu0 0.0
    %294 = vmatprep.subr.mxu0 0.0
    %295 = vmatpush1.msra.mxu0 0.0
    %296 = vmatprep.subr.mxu0 0.0
    %297 = vmatpush1.msra.mxu0 0.0
    %298 = vmatprep.subr.mxu0 0.0
    %299 = vmatpush1.msra.mxu0 0.0
    %300 = vmatprep.subr.mxu0 0.0
    %301 = vmatpush1.msra.mxu0 0.0
    %302 = vmatprep.subr.mxu0 0.0
    %303 = vmatpush1.msra.mxu0 0.0
    %304 = vmatprep.subr.mxu0 0.0
    %305 = vmatpush1.msra.mxu0 0.0
    %306 = vmatprep.subr.mxu0 0.0
    %307 = vmatpush1.msra.mxu0 0.0
    %308 = vmatprep.subr.mxu0 0.0
    %309 = vmatpush1.msra.mxu0 0.0
    %310 = vmatprep.mubr.f32.mxu0 0.0
    %v311 = vand.u32 %v66, 4294901760
    %v312 = vsub.f32 %v66, %v311
    %313 = vmatmul.mubr.f32.gmra.mrb[0].mxu0 %v312
    %v314 = vpop.f32.mrb[0].mxu0
    %v315 = vadd.f32 %v235, %v314
    %v316 = vpop.f32.mrb[0].mxu0
    %317 = vdwg.mxu0
    %318 = vmatprep.subr.mxu0 0.0
    %v319 = vand.u32 %v53, 4294901760
    %320 = vmatpush1.msra.mxu0 %v319
    %321 = vmatprep.subr.mxu0 0.0
    %v322 = vand.u32 %v54, 4294901760
    %323 = vmatpush1.msra.mxu0 %v322
    %324 = vmatprep.subr.mxu0 0.0
    %v325 = vand.u32 %v55, 4294901760
    %326 = vmatpush1.msra.mxu0 %v325
    %327 = vmatprep.subr.mxu0 0.0
    %v328 = vand.u32 %v56, 4294901760
    %329 = vmatpush1.msra.mxu0 %v328
    %330 = vmatprep.subr.mxu0 0.0
    %331 = vmatpush1.msra.mxu0 0.0
    %332 = vmatprep.subr.mxu0 0.0
    %333 = vmatpush1.msra.mxu0 0.0
    %334 = vmatprep.subr.mxu0 0.0
    %335 = vmatpush1.msra.mxu0 0.0
    %336 = vmatprep.subr.mxu0 0.0
    %337 = vmatpush1.msra.mxu0 0.0
    %338 = vmatprep.subr.mxu0 0.0
    %339 = vmatpush1.msra.mxu0 0.0
    %340 = vmatprep.subr.mxu0 0.0
    %341 = vmatpush1.msra.mxu0 0.0
    %342 = vmatprep.subr.mxu0 0.0
    %343 = vmatpush1.msra.mxu0 0.0
    %344 = vmatprep.subr.mxu0 0.0
    %345 = vmatpush1.msra.mxu0 0.0
    %346 = vmatprep.subr.mxu0 0.0
    %347 = vmatpush1.msra.mxu0 0.0
    %348 = vmatprep.subr.mxu0 0.0
    %349 = vmatpush1.msra.mxu0 0.0
    %350 = vmatprep.subr.mxu0 0.0
    %351 = vmatpush1.msra.mxu0 0.0
    %352 = vmatprep.subr.mxu0 0.0
    %353 = vmatpush1.msra.mxu0 0.0
    %354 = vmatprep.subr.mxu0 0.0
    %355 = vmatpush1.msra.mxu0 0.0
    %356 = vmatprep.subr.mxu0 0.0
    %357 = vmatpush1.msra.mxu0 0.0
    %358 = vmatprep.subr.mxu0 0.0
    %359 = vmatpush1.msra.mxu0 0.0
    %360 = vmatprep.subr.mxu0 0.0
    %361 = vmatpush1.msra.mxu0 0.0
    %362 = vmatprep.subr.mxu0 0.0
    %363 = vmatpush1.msra.mxu0 0.0
    %364 = vmatprep.subr.mxu0 0.0
    %365 = vmatpush1.msra.mxu0 0.0
    %366 = vmatprep.subr.mxu0 0.0
    %367 = vmatpush1.msra.mxu0 0.0
    %368 = vmatprep.subr.mxu0 0.0
    %369 = vmatpush1.msra.mxu0 0.0
    %370 = vmatprep.subr.mxu0 0.0
    %371 = vmatpush1.msra.mxu0 0.0
    %372 = vmatprep.subr.mxu0 0.0
    %373 = vmatpush1.msra.mxu0 0.0
    %374 = vmatprep.subr.mxu0 0.0
    %375 = vmatpush1.msra.mxu0 0.0
    %376 = vmatprep.subr.mxu0 0.0
    %377 = vmatpush1.msra.mxu0 0.0
    %378 = vmatprep.subr.mxu0 0.0
    %379 = vmatpush1.msra.mxu0 0.0
    %380 = vmatprep.subr.mxu0 0.0
    %381 = vmatpush1.msra.mxu0 0.0
    %382 = vmatprep.subr.mxu0 0.0
    %383 = vmatpush1.msra.mxu0 0.0
    %384 = vmatprep.subr.mxu0 0.0
    %385 = vmatpush1.msra.mxu0 0.0
    %386 = vmatprep.mubr.f32.mxu0 0.0
    %v387 = vand.u32 %v66, 4294901760
    %v388 = vsub.f32 %v66, %v387
    %v389 = vand.u32 %v388, 4294901760
    %390 = vmatmul.mubr.f32.gmra.mrb[0].mxu0 %v389
    %v391 = vpop.f32.mrb[0].mxu0
    %v392 = vadd.f32 %v315, %v391
    %v393 = vpop.f32.mrb[0].mxu0
    %394 = vdwg.mxu0
    %395 = vmatprep.subr.mxu0 0.0
    %v396 = vand.u32 %v53, 4294901760
    %v397 = vsub.f32 %v53, %v396
    %v398 = vand.u32 %v397, 4294901760
    %399 = vmatpush1.msra.mxu0 %v398
    %400 = vmatprep.subr.mxu0 0.0
    %v401 = vand.u32 %v54, 4294901760
    %v402 = vsub.f32 %v54, %v401
    %v403 = vand.u32 %v402, 4294901760
    %404 = vmatpush1.msra.mxu0 %v403
    %405 = vmatprep.subr.mxu0 0.0
    %v406 = vand.u32 %v55, 4294901760
    %v407 = vsub.f32 %v55, %v406
    %v408 = vand.u32 %v407, 4294901760
    %409 = vmatpush1.msra.mxu0 %v408
    %410 = vmatprep.subr.mxu0 0.0
    %v411 = vand.u32 %v56, 4294901760
    %v412 = vsub.f32 %v56, %v411
    %v413 = vand.u32 %v412, 4294901760
    %414 = vmatpush1.msra.mxu0 %v413
    %415 = vmatprep.subr.mxu0 0.0
    %416 = vmatpush1.msra.mxu0 0.0
    %417 = vmatprep.subr.mxu0 0.0
    %418 = vmatpush1.msra.mxu0 0.0
    %419 = vmatprep.subr.mxu0 0.0
    %420 = vmatpush1.msra.mxu0 0.0
    %421 = vmatprep.subr.mxu0 0.0
    %422 = vmatpush1.msra.mxu0 0.0
    %423 = vmatprep.subr.mxu0 0.0
    %424 = vmatpush1.msra.mxu0 0.0
    %425 = vmatprep.subr.mxu0 0.0
    %426 = vmatpush1.msra.mxu0 0.0
    %427 = vmatprep.subr.mxu0 0.0
    %428 = vmatpush1.msra.mxu0 0.0
    %429 = vmatprep.subr.mxu0 0.0
    %430 = vmatpush1.msra.mxu0 0.0
    %431 = vmatprep.subr.mxu0 0.0
    %432 = vmatpush1.msra.mxu0 0.0
    %433 = vmatprep.subr.mxu0 0.0
    %434 = vmatpush1.msra.mxu0 0.0
    %435 = vmatprep.subr.mxu0 0.0
    %436 = vmatpush1.msra.mxu0 0.0
    %437 = vmatprep.subr.mxu0 0.0
    %438 = vmatpush1.msra.mxu0 0.0
    %439 = vmatprep.subr.mxu0 0.0
    %440 = vmatpush1.msra.mxu0 0.0
    %441 = vmatprep.subr.mxu0 0.0
    %442 = vmatpush1.msra.mxu0 0.0
    %443 = vmatprep.subr.mxu0 0.0
    %444 = vmatpush1.msra.mxu0 0.0
    %445 = vmatprep.subr.mxu0 0.0
    %446 = vmatpush1.msra.mxu0 0.0
    %447 = vmatprep.subr.mxu0 0.0
    %448 = vmatpush1.msra.mxu0 0.0
    %449 = vmatprep.subr.mxu0 0.0
    %450 = vmatpush1.msra.mxu0 0.0
    %451 = vmatprep.subr.mxu0 0.0
    %452 = vmatpush1.msra.mxu0 0.0
    %453 = vmatprep.subr.mxu0 0.0
    %454 = vmatpush1.msra.mxu0 0.0
    %455 = vmatprep.subr.mxu0 0.0
    %456 = vmatpush1.msra.mxu0 0.0
    %457 = vmatprep.subr.mxu0 0.0
    %458 = vmatpush1.msra.mxu0 0.0
    %459 = vmatprep.subr.mxu0 0.0
    %460 = vmatpush1.msra.mxu0 0.0
    %461 = vmatprep.subr.mxu0 0.0
    %462 = vmatpush1.msra.mxu0 0.0
    %463 = vmatprep.subr.mxu0 0.0
    %464 = vmatpush1.msra.mxu0 0.0
    %465 = vmatprep.subr.mxu0 0.0
    %466 = vmatpush1.msra.mxu0 0.0
    %467 = vmatprep.subr.mxu0 0.0
    %468 = vmatpush1.msra.mxu0 0.0
    %469 = vmatprep.subr.mxu0 0.0
    %470 = vmatpush1.msra.mxu0 0.0
    %471 = vmatprep.mubr.f32.mxu0 0.0
    %v472 = vand.u32 %v66, 4294901760
    %473 = vmatmul.mubr.f32.gmra.mrb[0].mxu0 %v472
    %v474 = vpop.f32.mrb[0].mxu0
    %v475 = vadd.f32 %v392, %v474
    %v476 = vpop.f32.mrb[0].mxu0
    %477 = vdwg.mxu0
    %478 = vmatprep.subr.mxu0 0.0
    %v479 = vand.u32 %v53, 4294901760
    %480 = vmatpush1.msra.mxu0 %v479
    %481 = vmatprep.subr.mxu0 0.0
    %v482 = vand.u32 %v54, 4294901760
    %483 = vmatpush1.msra.mxu0 %v482
    %484 = vmatprep.subr.mxu0 0.0
    %v485 = vand.u32 %v55, 4294901760
    %486 = vmatpush1.msra.mxu0 %v485
    %487 = vmatprep.subr.mxu0 0.0
    %v488 = vand.u32 %v56, 4294901760
    %489 = vmatpush1.msra.mxu0 %v488
    %490 = vmatprep.subr.mxu0 0.0
    %491 = vmatpush1.msra.mxu0 0.0
    %492 = vmatprep.subr.mxu0 0.0
    %493 = vmatpush1.msra.mxu0 0.0
    %494 = vmatprep.subr.mxu0 0.0
    %495 = vmatpush1.msra.mxu0 0.0
    %496 = vmatprep.subr.mxu0 0.0
    %497 = vmatpush1.msra.mxu0 0.0
    %498 = vmatprep.subr.mxu0 0.0
    %499 = vmatpush1.msra.mxu0 0.0
    %500 = vmatprep.subr.mxu0 0.0
    %501 = vmatpush1.msra.mxu0 0.0
    %502 = vmatprep.subr.mxu0 0.0
    %503 = vmatpush1.msra.mxu0 0.0
    %504 = vmatprep.subr.mxu0 0.0
    %505 = vmatpush1.msra.mxu0 0.0
    %506 = vmatprep.subr.mxu0 0.0
    %507 = vmatpush1.msra.mxu0 0.0
    %508 = vmatprep.subr.mxu0 0.0
    %509 = vmatpush1.msra.mxu0 0.0
    %510 = vmatprep.subr.mxu0 0.0
    %511 = vmatpush1.msra.mxu0 0.0
    %512 = vmatprep.subr.mxu0 0.0
    %513 = vmatpush1.msra.mxu0 0.0
    %514 = vmatprep.subr.mxu0 0.0
    %515 = vmatpush1.msra.mxu0 0.0
    %516 = vmatprep.subr.mxu0 0.0
    %517 = vmatpush1.msra.mxu0 0.0
    %518 = vmatprep.subr.mxu0 0.0
    %519 = vmatpush1.msra.mxu0 0.0
    %520 = vmatprep.subr.mxu0 0.0
    %521 = vmatpush1.msra.mxu0 0.0
    %522 = vmatprep.subr.mxu0 0.0
    %523 = vmatpush1.msra.mxu0 0.0
    %524 = vmatprep.subr.mxu0 0.0
    %525 = vmatpush1.msra.mxu0 0.0
    %526 = vmatprep.subr.mxu0 0.0
    %527 = vmatpush1.msra.mxu0 0.0
    %528 = vmatprep.subr.mxu0 0.0
    %529 = vmatpush1.msra.mxu0 0.0
    %530 = vmatprep.subr.mxu0 0.0
    %531 = vmatpush1.msra.mxu0 0.0
    %532 = vmatprep.subr.mxu0 0.0
    %533 = vmatpush1.msra.mxu0 0.0
    %534 = vmatprep.subr.mxu0 0.0
    %535 = vmatpush1.msra.mxu0 0.0
    %536 = vmatprep.subr.mxu0 0.0
    %537 = vmatpush1.msra.mxu0 0.0
    %538 = vmatprep.subr.mxu0 0.0
    %539 = vmatpush1.msra.mxu0 0.0
    %540 = vmatprep.subr.mxu0 0.0
    %541 = vmatpush1.msra.mxu0 0.0
    %542 = vmatprep.subr.mxu0 0.0
    %543 = vmatpush1.msra.mxu0 0.0
    %544 = vmatprep.subr.mxu0 0.0
    %545 = vmatpush1.msra.mxu0 0.0
    %546 = vmatprep.mubr.f32.mxu0 0.0
    %v547 = vand.u32 %v66, 4294901760
    %548 = vmatmul.mubr.f32.gmra.mrb[0].mxu0 %v547
    %v549 = vpop.f32.mrb[0].mxu0
    %v550 = vadd.f32 %v475, %v549
    %v551 = vpop.f32.mrb[0].mxu0
    %552 = vdwg.mxu0
    %v553 = vadd.f32 %v550, 1.0
    %555 = vrot.lane.b32.xlu0 %v553, 32
    %v556 = vpop.permute.xlu0 %555
    %558 = vrot.lane.b32.xlu0 %v553, 64
    %v559 = vpop.permute.xlu0 %558
    %561 = vrot.lane.b32.xlu0 %v553, 96
    %v562 = vpop.permute.xlu0 %561
    %v564 = vsel %vm64, %v553, %v556
    %vm565 = vcmask 523264
    %v566 = vsel %vm565, %v564, %v559
    %vm567 = vcmask 785408
    %v568 = vsel %vm567, %v566, %v562
    %569 = vst [vmem:[#allocation7] sm:$0x3] %v568
    %571 = vrot.lane.b32.xlu0 %v550, 96
    %v572 = vpop.permute.xlu0 %571
    %574 = vrot.lane.b32.xlu0 %v550, 32
    %v575 = vpop.permute.xlu0 %574
    %577 = vrot.lane.b32.xlu0 %v550, 64
    %v578 = vpop.permute.xlu0 %577
    %v580 = vsel %vm64, %v572, %v550
    %v581 = vsel %vm565, %v580, %v575
    %v582 = vsel %vm567, %v581, %v578
    %583 = vst [vmem:[#allocation8] sm:$0x3] %v582
    %vm584 = vcmask 254976
    %585 = vst.msk [vmem:[#allocation10] sm:$0x3] %vm584, %v559
    // Predicated region
    $region22: #{tpu_custom_call.1} parent=1 // pred_check
      _
    $region23: #{tpu_custom_call.1} parent=1 // pred_check_branch
      %587 = sbr.rel (0) target = $region25
    $region24: #{tpu_custom_call.1} parent=1 // pred_region
      %s589 = ssub.s32 32, 32
      %590 = vsyncadd [#allocation4], %s589
      %s592 = sshll.u32 [#allocation7], 4
      %s593 = int_to_ptr.vmem [resolvable:$true] %s592
      %595 = dma.vmem_to_hbm [thread:$0]  %s593, 32, %s3, [#allocation4]
    $region25: #{tpu_custom_call.1} parent=1 // pred_fallthru
      _
    // Predicated region
    $region26: #{tpu_custom_call.1} parent=1 // pred_check
      _
    $region27: #{tpu_custom_call.1} parent=1 // pred_check_branch
      %597 = sbr.rel (0) target = $region29
    $region28: #{tpu_custom_call.1} parent=1 // pred_region
      %s599 = ssub.s32 32, 32
      %600 = vsyncadd [#allocation9], %s599
      %s602 = sshll.u32 [#allocation8], 4
      %s603 = int_to_ptr.vmem [resolvable:$true] %s602
      %605 = dma.vmem_to_hbm [thread:$0]  %s603, 32, %s4, [#allocation9]
    $region29: #{tpu_custom_call.1} parent=1 // pred_fallthru
      _
    // Predicated region
    $region30: #{tpu_custom_call.1} parent=1 // pred_check
      _
    $region31: #{tpu_custom_call.1} parent=1 // pred_check_branch
      %607 = sbr.rel (0) target = $region33
    $region32: #{tpu_custom_call.1} parent=1 // pred_region
      %s609 = ssub.s32 32, 32
      %610 = vsyncadd [#allocation9], %s609
      %s612 = sshll.u32 [#allocation10], 4
      %s613 = int_to_ptr.vmem [resolvable:$true] %s612
      %615 = dma.vmem_to_hbm [thread:$0]  %s613, 32, %s5, [#allocation9]
    $region33: #{tpu_custom_call.1} parent=1 // pred_fallthru
      _
    // Predicated region
    $region34: #{tpu_custom_call.1} parent=1 // pred_check
      _
    $region35: #{tpu_custom_call.1} parent=1 // pred_check_branch
      %617 = sbr.rel (0) target = $region37
    $region36: #{tpu_custom_call.1} parent=1 // pred_region
      %618 = dma.done [#allocation4], 32
    $region37: #{tpu_custom_call.1} parent=1 // pred_fallthru
      _
    // Predicated region
    $region38: #{tpu_custom_call.1} parent=1 // pred_check
      _
    $region39: #{tpu_custom_call.1} parent=1 // pred_check_branch
      %620 = sbr.rel (0) target = $region41
    $region40: #{tpu_custom_call.1} parent=1 // pred_region
      %621 = dma.done [#allocation9], 32
    $region41: #{tpu_custom_call.1} parent=1 // pred_fallthru
      _
    // Predicated region
    $region42: #{tpu_custom_call.1} parent=1 // pred_check
      _
    $region43: #{tpu_custom_call.1} parent=1 // pred_check_branch
      %623 = sbr.rel (0) target = $region45
    $region44: #{tpu_custom_call.1} parent=1 // pred_region
      %624 = dma.done [#allocation9], 32
    $region45: #{tpu_custom_call.1} parent=1 // pred_fallthru
      _
    %625 = vsyncpa [#allocation3], 1
    %626 = vsyncpa [#allocation6], 1
    %627 = vsyncpa [#allocation4], 1
    %628 = vsyncpa [#allocation9], 1

</llo_original>
